<compile_context>
chip_gen: v5e
topology: v5e:2x2
jax: 0.10.0
libtpu: 0.0.40
codegen_flags: <defaults>
</compile_context>

<pallas_src>
import functools

import jax
import jax.numpy as jnp
from jax.experimental import pallas as pl
from jax.experimental.pallas import tpu as pltpu

LANE = 128
SUBLANE = 8


def _gelu_exact(x):
    # PyTorch F.gelu default: exact erf-based GELU.
    return 0.5 * x * (1.0 + jax.lax.erf(x * 0.7071067811865476))


def mlp_kernel(x_ref, w1_ref, b1_ref, w2_ref, b2_ref, w3_ref, b3_ref, o_ref):
    # fc1 -> GELU (all f32 on the MXU/VPU/EUP)
    h = jnp.dot(x_ref[...], w1_ref[...], preferred_element_type=jnp.float32)
    h = _gelu_exact(h + b1_ref[...])
    # fc2 -> GELU
    h = jnp.dot(h, w2_ref[...], preferred_element_type=jnp.float32)
    h = _gelu_exact(h + b2_ref[...])
    # fc3 (no activation)
    out = jnp.dot(h, w3_ref[...], preferred_element_type=jnp.float32)
    out = out + b3_ref[...]
    o_ref[...] = out.astype(o_ref.dtype)


def _round_up(n, m):
    return ((n + m - 1) // m) * m


def _pad2d(a, rows, cols):
    r, c = a.shape
    if r == rows and c == cols:
        return a
    return jnp.pad(a, ((0, rows - r), (0, cols - c)))


@functools.partial(jax.jit, static_argnames=("tm",))
def mlp_forward(x, w1, b1, w2, b2, w3, b3, *, tm=None):
    """Fused 3-layer MLP with GELU. Weights stored [in, out], biases [1, out]."""
    batch, in_dim = x.shape
    hid_dim = w1.shape[1]
    out_dim = w3.shape[1]

    # Lane-dense padding of feature dims; sublane/batch padding for the M tile.
    in_p = _round_up(in_dim, LANE)
    hid_p = _round_up(hid_dim, LANE)
    out_p = _round_up(out_dim, LANE)
    bp = _round_up(batch, SUBLANE)
    if tm is None:
        tm = 128 if bp >= 128 else SUBLANE
    bp = _round_up(bp, tm)

    x_p = _pad2d(x, bp, in_p)
    w1_p, b1_p = _pad2d(w1, in_p, hid_p), _pad2d(b1, 1, hid_p)
    w2_p, b2_p = _pad2d(w2, hid_p, hid_p), _pad2d(b2, 1, hid_p)
    w3_p, b3_p = _pad2d(w3, hid_p, out_p), _pad2d(b3, 1, out_p)

    grid = (bp // tm,)

    # Advisory cost hint for XLA scheduling around the custom call.
    flops = 2 * bp * (in_p * hid_p + hid_p * hid_p + hid_p * out_p)
    bytes_accessed = 4 * (
        bp * in_p + in_p * hid_p + hid_p + hid_p * hid_p + hid_p
        + hid_p * out_p + out_p + bp * out_p
    )
    cost = pl.CostEstimate(
        flops=flops, transcendentals=2 * bp * hid_p, bytes_accessed=bytes_accessed
    )

    out_padded = pl.pallas_call(
        mlp_kernel,
        out_shape=jax.ShapeDtypeStruct((bp, out_p), x.dtype),
        grid=grid,
        in_specs=[
            pl.BlockSpec((tm, in_p), lambda i: (i, 0)),      # x: tiled over batch
            pl.BlockSpec((in_p, hid_p), lambda i: (0, 0)),   # w1: VMEM-resident
            pl.BlockSpec((1, hid_p), lambda i: (0, 0)),      # b1
            pl.BlockSpec((hid_p, hid_p), lambda i: (0, 0)),  # w2
            pl.BlockSpec((1, hid_p), lambda i: (0, 0)),      # b2
            pl.BlockSpec((hid_p, out_p), lambda i: (0, 0)),  # w3
            pl.BlockSpec((1, out_p), lambda i: (0, 0)),      # b3
        ],
        out_specs=pl.BlockSpec((tm, out_p), lambda i: (i, 0)),
        compiler_params=pltpu.CompilerParams(
            dimension_semantics=("parallel",),
        ),
        cost_estimate=cost,
    )(x_p, w1_p, b1_p, w2_p, b2_p, w3_p, b3_p)

    # Slice away batch / lane padding.
    return out_padded[:batch, :out_dim]


def init_linear_params(key, in_features, out_features, dtype=jnp.float32):
    """torch.nn.Linear-style init: U(-1/sqrt(fan_in), 1/sqrt(fan_in))."""
    kw, kb = jax.random.split(key)
    bound = 1.0 / jnp.sqrt(in_features)
    # stored as [in, out] (transposed vs PyTorch) so the kernel does x @ W
    w = jax.random.uniform(kw, (in_features, out_features), dtype,
                           minval=-bound, maxval=bound)
    b = jax.random.uniform(kb, (1, out_features), dtype,
                           minval=-bound, maxval=bound)
    return w, b


if __name__ == "__main__":
    input_dim, hidden_dim, output_dim = 32, 64, 16
    batch = 16  # small; padded to TM=8 tiles -> grid=(2,)

    key = jax.random.PRNGKey(0)
    kx, k1, k2, k3 = jax.random.split(key, 4)

    x = jax.random.normal(kx, (batch, input_dim), jnp.float32)
    w1, b1 = init_linear_params(k1, input_dim, hidden_dim)
    w2, b2 = init_linear_params(k2, hidden_dim, hidden_dim)
    w3, b3 = init_linear_params(k3, hidden_dim, output_dim)

    out = mlp_forward(x, w1, b1, w2, b2, w3, b3)
    out = jax.block_until_ready(out)

    # Plain-JAX reference (same math, same params, exact erf GELU like PyTorch).
    h = _gelu_exact(x @ w1 + b1)
    h = _gelu_exact(h @ w2 + b2)
    ref = h @ w3 + b3

    assert out.shape == (batch, output_dim)
    assert jnp.allclose(out, ref, atol=1e-5, rtol=1e-5), (
        float(jnp.max(jnp.abs(out - ref)))
    )

    print("KERNEL_OK")
</pallas_src>

<mosaic_0001>
module attributes {stable_mosaic.version = 11 : i64} {
  func.func @mlp_kernel(%arg0: i32, %arg1: memref<8x128xf32, #tpu.memory_space<vmem>>, %arg2: memref<128x128xf32, #tpu.memory_space<vmem>>, %arg3: memref<1x128xf32, #tpu.memory_space<vmem>>, %arg4: memref<128x128xf32, #tpu.memory_space<vmem>>, %arg5: memref<1x128xf32, #tpu.memory_space<vmem>>, %arg6: memref<128x128xf32, #tpu.memory_space<vmem>>, %arg7: memref<1x128xf32, #tpu.memory_space<vmem>>, %arg8: memref<8x128xf32, #tpu.memory_space<vmem>>) attributes {dimension_semantics = [#tpu.dimension_semantics<parallel>], iteration_bounds = array<i64: 2>, scalar_prefetch = 0 : i64, scratch_operands = 0 : i64, tpu.core_type = #tpu.core_type<tc>, window_params = [{transform_indices = @transform_0, window_bounds = array<i64: 8, 128>}, {pipeline_mode = #tpu.pipeline_mode<synchronous>, transform_indices = @transform_1, window_bounds = array<i64: 128, 128>}, {pipeline_mode = #tpu.pipeline_mode<synchronous>, transform_indices = @transform_2, window_bounds = array<i64: 1, 128>}, {pipeline_mode = #tpu.pipeline_mode<synchronous>, transform_indices = @transform_3, window_bounds = array<i64: 128, 128>}, {pipeline_mode = #tpu.pipeline_mode<synchronous>, transform_indices = @transform_4, window_bounds = array<i64: 1, 128>}, {pipeline_mode = #tpu.pipeline_mode<synchronous>, transform_indices = @transform_5, window_bounds = array<i64: 128, 128>}, {pipeline_mode = #tpu.pipeline_mode<synchronous>, transform_indices = @transform_6, window_bounds = array<i64: 1, 128>}, {transform_indices = @transform_7, window_bounds = array<i64: 8, 128>}]} {
    %c0 = arith.constant 0 : index
    %c0_0 = arith.constant 0 : index
    %0 = vector.load %arg1[%c0, %c0_0] : memref<8x128xf32, #tpu.memory_space<vmem>>, vector<8x128xf32>
    %c0_1 = arith.constant 0 : index
    %c0_2 = arith.constant 0 : index
    %1 = vector.load %arg2[%c0_1, %c0_2] : memref<128x128xf32, #tpu.memory_space<vmem>>, vector<128x128xf32>
    %cst = arith.constant dense<0.000000e+00> : vector<8x128xf32>
    %2 = tpu.matmul %0, %1, %cst {dimension_numbers = #tpu.dot_dimension_numbers<[1], [0], [0], [1], [0, 0, 1, 1], [], []>} : vector<8x128xf32>, vector<128x128xf32>, vector<8x128xf32> -> vector<8x128xf32>
    %c0_3 = arith.constant 0 : index
    %c0_4 = arith.constant 0 : index
    %3 = vector.load %arg3[%c0_3, %c0_4] : memref<1x128xf32, #tpu.memory_space<vmem>>, vector<1x128xf32>
    %4 = vector.broadcast %3 : vector<1x128xf32> to vector<8x128xf32>
    %5 = arith.addf %2, %4 : vector<8x128xf32>
    %cst_5 = arith.constant 5.000000e-01 : f32
    %6 = vector.broadcast %cst_5 : f32 to vector<8x128xf32>
    %7 = arith.mulf %6, %5 : vector<8x128xf32>
    %cst_6 = arith.constant 0.707106769 : f32
    %8 = vector.broadcast %cst_6 : f32 to vector<8x128xf32>
    %9 = arith.mulf %5, %8 : vector<8x128xf32>
    %10 = math.erf %9 : vector<8x128xf32>
    %cst_7 = arith.constant 1.000000e+00 : f32
    %11 = vector.broadcast %cst_7 : f32 to vector<8x128xf32>
    %12 = arith.addf %11, %10 : vector<8x128xf32>
    %13 = arith.mulf %7, %12 : vector<8x128xf32>
    %c0_8 = arith.constant 0 : index
    %c0_9 = arith.constant 0 : index
    %14 = vector.load %arg4[%c0_8, %c0_9] : memref<128x128xf32, #tpu.memory_space<vmem>>, vector<128x128xf32>
    %cst_10 = arith.constant dense<0.000000e+00> : vector<8x128xf32>
    %15 = tpu.matmul %13, %14, %cst_10 {dimension_numbers = #tpu.dot_dimension_numbers<[1], [0], [0], [1], [0, 0, 1, 1], [], []>} : vector<8x128xf32>, vector<128x128xf32>, vector<8x128xf32> -> vector<8x128xf32>
    %c0_11 = arith.constant 0 : index
    %c0_12 = arith.constant 0 : index
    %16 = vector.load %arg5[%c0_11, %c0_12] : memref<1x128xf32, #tpu.memory_space<vmem>>, vector<1x128xf32>
    %17 = vector.broadcast %16 : vector<1x128xf32> to vector<8x128xf32>
    %18 = arith.addf %15, %17 : vector<8x128xf32>
    %cst_13 = arith.constant 5.000000e-01 : f32
    %19 = vector.broadcast %cst_13 : f32 to vector<8x128xf32>
    %20 = arith.mulf %19, %18 : vector<8x128xf32>
    %cst_14 = arith.constant 0.707106769 : f32
    %21 = vector.broadcast %cst_14 : f32 to vector<8x128xf32>
    %22 = arith.mulf %18, %21 : vector<8x128xf32>
    %23 = math.erf %22 : vector<8x128xf32>
    %cst_15 = arith.constant 1.000000e+00 : f32
    %24 = vector.broadcast %cst_15 : f32 to vector<8x128xf32>
    %25 = arith.addf %24, %23 : vector<8x128xf32>
    %26 = arith.mulf %20, %25 : vector<8x128xf32>
    %c0_16 = arith.constant 0 : index
    %c0_17 = arith.constant 0 : index
    %27 = vector.load %arg6[%c0_16, %c0_17] : memref<128x128xf32, #tpu.memory_space<vmem>>, vector<128x128xf32>
    %cst_18 = arith.constant dense<0.000000e+00> : vector<8x128xf32>
    %28 = tpu.matmul %26, %27, %cst_18 {dimension_numbers = #tpu.dot_dimension_numbers<[1], [0], [0], [1], [0, 0, 1, 1], [], []>} : vector<8x128xf32>, vector<128x128xf32>, vector<8x128xf32> -> vector<8x128xf32>
    %c0_19 = arith.constant 0 : index
    %c0_20 = arith.constant 0 : index
    %29 = vector.load %arg7[%c0_19, %c0_20] : memref<1x128xf32, #tpu.memory_space<vmem>>, vector<1x128xf32>
    %30 = vector.broadcast %29 : vector<1x128xf32> to vector<8x128xf32>
    %31 = arith.addf %28, %30 : vector<8x128xf32>
    %c0_21 = arith.constant 0 : index
    %c0_22 = arith.constant 0 : index
    %32 = vector.load %arg8[%c0_21, %c0_22] : memref<8x128xf32, #tpu.memory_space<vmem>>, vector<8x128xf32>
    tpu.vector_store %arg8[%c0_21, %c0_22], %31 {strides = array<i32>} : memref<8x128xf32, #tpu.memory_space<vmem>>, vector<8x128xf32>,
    return
  }
  func.func @transform_0(%arg0: i32) -> (i32, i32) {
    %c0_i32 = arith.constant 0 : i32
    %c0_i32_0 = arith.constant 0 : i32
    return %arg0, %c0_i32 : i32, i32
  }
  func.func @transform_1(%arg0: i32) -> (i32, i32) {
    %c0_i32 = arith.constant 0 : i32
    %c0_i32_0 = arith.constant 0 : i32
    %c0_i32_1 = arith.constant 0 : i32
    return %c0_i32, %c0_i32_0 : i32, i32
  }
  func.func @transform_2(%arg0: i32) -> (i32, i32) {
    %c0_i32 = arith.constant 0 : i32
    %c0_i32_0 = arith.constant 0 : i32
    %c0_i32_1 = arith.constant 0 : i32
    return %c0_i32, %c0_i32_0 : i32, i32
  }
  func.func @transform_3(%arg0: i32) -> (i32, i32) {
    %c0_i32 = arith.constant 0 : i32
    %c0_i32_0 = arith.constant 0 : i32
    %c0_i32_1 = arith.constant 0 : i32
    return %c0_i32, %c0_i32_0 : i32, i32
  }
  func.func @transform_4(%arg0: i32) -> (i32, i32) {
    %c0_i32 = arith.constant 0 : i32
    %c0_i32_0 = arith.constant 0 : i32
    %c0_i32_1 = arith.constant 0 : i32
    return %c0_i32, %c0_i32_0 : i32, i32
  }
  func.func @transform_5(%arg0: i32) -> (i32, i32) {
    %c0_i32 = arith.constant 0 : i32
    %c0_i32_0 = arith.constant 0 : i32
    %c0_i32_1 = arith.constant 0 : i32
    return %c0_i32, %c0_i32_0 : i32, i32
  }
  func.func @transform_6(%arg0: i32) -> (i32, i32) {
    %c0_i32 = arith.constant 0 : i32
    %c0_i32_0 = arith.constant 0 : i32
    %c0_i32_1 = arith.constant 0 : i32
    return %c0_i32, %c0_i32_0 : i32, i32
  }
  func.func @transform_7(%arg0: i32) -> (i32, i32) {
    %c0_i32 = arith.constant 0 : i32
    %c0_i32_0 = arith.constant 0 : i32
    return %arg0, %c0_i32 : i32, i32
  }
}

</mosaic_0001>

<llo_original>
// kernel: mlp_forward.1
$region0: #{mlp_forward.1}
  #allocation0 [shape = 'u32[]', space=smem, size = 0x4, offset = 0x4, fixed_abs, tag = 'smem constant byte address 0x4 - core index']
  #allocation1 [shape = 'u32[72,128]{1,0:T(1,128)}', space=vmem, size = 0x9000, scoped, tag = 'internal scratch']
  %s0 = inlined_call_operand.vmem [shape: f32[16,128], index: 0, kind: input, shape index: {}]
  %s1 = inlined_call_operand.vmem [shape: f32[128,128], index: 1, kind: input, shape index: {}]
  %s2 = inlined_call_operand.vmem [shape: f32[1,128], index: 2, kind: input, shape index: {}]
  %s3 = inlined_call_operand.vmem [shape: f32[128,128], index: 3, kind: input, shape index: {}]
  %s4 = inlined_call_operand.vmem [shape: f32[1,128], index: 4, kind: input, shape index: {}]
  %s5 = inlined_call_operand.vmem [shape: f32[128,128], index: 5, kind: input, shape index: {}]
  %s6 = inlined_call_operand.vmem [shape: f32[1,128], index: 6, kind: input, shape index: {}]
  %s7 = inlined_call_operand.hbm [shape: f32[16,128], index: 7, kind: output, shape index: {}]
  %s8 = sld [smem:[#allocation0]]
  $region61: #{mlp_forward.1} parent=0
    _
  %s10 = ssub.s32 1, %s8
  %s11 = scalar_select 0, %s10, %s8
  $region1: #{mlp_forward.1} parent=0
    #allocation2 [shape = 'u8[8192]{0}', space=vmem, size = 0x2000, scoped, tag = 'output window, operand 0']
    #allocation3 [shape = 's32[2]{0}', space=sflag, size = 0x8, scoped, tag = 'scoped memory for mlp_forward.1']
    %12 = vsyncpa [#allocation3], 0
    %s13 = scalar_lea.sflag [#allocation3], 1
    %14 = vsyncpa %s13, 0
    loop: start=0, step=1, limit=4
    $region2: #{mlp_forward.1} parent=1 // loop_pre_header
      _
    $region3: #{mlp_forward.1} parent=1 // loop_header
      %s16 = sphi 0, %s20
      %p17 = scmp.ge.s32.totalorder %s16, 4
      %s26 = sphi 0, %s28
      %s29 = sphi 0, %s26
      %s30 = sphi 0, %s29
      %s46 = sphi 0, %s30
      %s50 = sphi 0, %s50
      %s52 = sphi 0, %s50
      %s53 = sphi 0, %s52
      %s67 = sphi 0, %s53
      %s71 = sphi 0, %s71
      %s73 = sphi 0, %s71
      %s74 = sphi 0, %s73
      %s88 = sphi 0, %s74
      %s92 = sphi 0, %s92
      %s94 = sphi 0, %s92
      %s95 = sphi 0, %s94
      %s109 = sphi 0, %s95
      %s113 = sphi 0, %s113
      %s115 = sphi 0, %s113
      %s116 = sphi 0, %s115
      %s130 = sphi 0, %s116
      %s134 = sphi 0, %s134
      %s136 = sphi 0, %s134
      %s137 = sphi 0, %s136
      %s151 = sphi 0, %s137
      %s155 = sphi 0, %s155
      %s157 = sphi 0, %s155
      %s158 = sphi 0, %s157
      %s172 = sphi 0, %s158
      %s178 = sphi 0, %s180
      %s181 = sphi 0, %s178
      %s182 = sphi 0, %s181
      %s198 = sphi 0, %s182
    $region4: #{mlp_forward.1} parent=1 // loop_header_branch
      %19 = sbr.rel (%p17) target = $region8
    $region5: #{mlp_forward.1} parent=1 // loop_body
      %s21 = ssub.s32 %s16, 1
      %s22 = ssub.s32 %s16, 2
      %s23 = sadd.s32 %s16, 1
      %s24 = ssub.s32 %s16, %s23
      %p25 = scmp.eq.s32.totalorder %s24, 0
      %s27 = sadd.s32 %s26, 1
      %s28 = scalar_select %p25, %s26, %s27
      %p31 = pneg %p25
      %p32 = scmp.eq.s32.totalorder %s16, 1
      %p33 = por %p31, %p32
      %p34 = scmp.ne.s32.totalorder %s26, %s29
      %p35 = scmp.eq.s32.totalorder %s16, 0
      %p36 = por %p34, %p35
      %p37 = scmp.ne.s32.totalorder %s26, %s29
      %p38 = scmp.eq.s32.totalorder %s21, 1
      %p39 = por %p37, %p38
      %p40 = scmp.ne.s32.totalorder %s29, %s30
      %p41 = scmp.eq.s32.totalorder %s21, 0
      %p42 = por %p40, %p41
      %p43 = scmp.ne.s32.totalorder %s29, %s30
      %p44 = scmp.eq.s32.totalorder %s22, 1
      %p45 = por %p43, %p44
      %p47 = scmp.ne.s32.totalorder %s30, %s46
      %p48 = scmp.eq.s32.totalorder %s22, 0
      %p49 = por %p47, %p48
      %s51 = sadd.s32 %s50, 1
      %p54 = scmp.eq.s32.totalorder %s16, 1
      %p55 = scmp.ne.s32.totalorder %s50, %s52
      %p56 = scmp.eq.s32.totalorder %s16, 0
      %p57 = por %p55, %p56
      %p58 = scmp.ne.s32.totalorder %s50, %s52
      %p59 = scmp.eq.s32.totalorder %s21, 1
      %p60 = por %p58, %p59
      %p61 = scmp.ne.s32.totalorder %s52, %s53
      %p62 = scmp.eq.s32.totalorder %s21, 0
      %p63 = por %p61, %p62
      %p64 = scmp.ne.s32.totalorder %s52, %s53
      %p65 = scmp.eq.s32.totalorder %s22, 1
      %p66 = por %p64, %p65
      %p68 = scmp.ne.s32.totalorder %s53, %s67
      %p69 = scmp.eq.s32.totalorder %s22, 0
      %p70 = por %p68, %p69
      %s72 = sadd.s32 %s71, 1
      %p75 = scmp.eq.s32.totalorder %s16, 1
      %p76 = scmp.ne.s32.totalorder %s71, %s73
      %p77 = scmp.eq.s32.totalorder %s16, 0
      %p78 = por %p76, %p77
      %p79 = scmp.ne.s32.totalorder %s71, %s73
      %p80 = scmp.eq.s32.totalorder %s21, 1
      %p81 = por %p79, %p80
      %p82 = scmp.ne.s32.totalorder %s73, %s74
      %p83 = scmp.eq.s32.totalorder %s21, 0
      %p84 = por %p82, %p83
      %p85 = scmp.ne.s32.totalorder %s73, %s74
      %p86 = scmp.eq.s32.totalorder %s22, 1
      %p87 = por %p85, %p86
      %p89 = scmp.ne.s32.totalorder %s74, %s88
      %p90 = scmp.eq.s32.totalorder %s22, 0
      %p91 = por %p89, %p90
      %s93 = sadd.s32 %s92, 1
      %p96 = scmp.eq.s32.totalorder %s16, 1
      %p97 = scmp.ne.s32.totalorder %s92, %s94
      %p98 = scmp.eq.s32.totalorder %s16, 0
      %p99 = por %p97, %p98
      %p100 = scmp.ne.s32.totalorder %s92, %s94
      %p101 = scmp.eq.s32.totalorder %s21, 1
      %p102 = por %p100, %p101
      %p103 = scmp.ne.s32.totalorder %s94, %s95
      %p104 = scmp.eq.s32.totalorder %s21, 0
      %p105 = por %p103, %p104
      %p106 = scmp.ne.s32.totalorder %s94, %s95
      %p107 = scmp.eq.s32.totalorder %s22, 1
      %p108 = por %p106, %p107
      %p110 = scmp.ne.s32.totalorder %s95, %s109
      %p111 = scmp.eq.s32.totalorder %s22, 0
      %p112 = por %p110, %p111
      %s114 = sadd.s32 %s113, 1
      %p117 = scmp.eq.s32.totalorder %s16, 1
      %p118 = scmp.ne.s32.totalorder %s113, %s115
      %p119 = scmp.eq.s32.totalorder %s16, 0
      %p120 = por %p118, %p119
      %p121 = scmp.ne.s32.totalorder %s113, %s115
      %p122 = scmp.eq.s32.totalorder %s21, 1
      %p123 = por %p121, %p122
      %p124 = scmp.ne.s32.totalorder %s115, %s116
      %p125 = scmp.eq.s32.totalorder %s21, 0
      %p126 = por %p124, %p125
      %p127 = scmp.ne.s32.totalorder %s115, %s116
      %p128 = scmp.eq.s32.totalorder %s22, 1
      %p129 = por %p127, %p128
      %p131 = scmp.ne.s32.totalorder %s116, %s130
      %p132 = scmp.eq.s32.totalorder %s22, 0
      %p133 = por %p131, %p132
      %s135 = sadd.s32 %s134, 1
      %p138 = scmp.eq.s32.totalorder %s16, 1
      %p139 = scmp.ne.s32.totalorder %s134, %s136
      %p140 = scmp.eq.s32.totalorder %s16, 0
      %p141 = por %p139, %p140
      %p142 = scmp.ne.s32.totalorder %s134, %s136
      %p143 = scmp.eq.s32.totalorder %s21, 1
      %p144 = por %p142, %p143
      %p145 = scmp.ne.s32.totalorder %s136, %s137
      %p146 = scmp.eq.s32.totalorder %s21, 0
      %p147 = por %p145, %p146
      %p148 = scmp.ne.s32.totalorder %s136, %s137
      %p149 = scmp.eq.s32.totalorder %s22, 1
      %p150 = por %p148, %p149
      %p152 = scmp.ne.s32.totalorder %s137, %s151
      %p153 = scmp.eq.s32.totalorder %s22, 0
      %p154 = por %p152, %p153
      %s156 = sadd.s32 %s155, 1
      %p159 = scmp.eq.s32.totalorder %s16, 1
      %p160 = scmp.ne.s32.totalorder %s155, %s157
      %p161 = scmp.eq.s32.totalorder %s16, 0
      %p162 = por %p160, %p161
      %p163 = scmp.ne.s32.totalorder %s155, %s157
      %p164 = scmp.eq.s32.totalorder %s21, 1
      %p165 = por %p163, %p164
      %p166 = scmp.ne.s32.totalorder %s157, %s158
      %p167 = scmp.eq.s32.totalorder %s21, 0
      %p168 = por %p166, %p167
      %p169 = scmp.ne.s32.totalorder %s157, %s158
      %p170 = scmp.eq.s32.totalorder %s22, 1
      %p171 = por %p169, %p170
      %p173 = scmp.ne.s32.totalorder %s158, %s172
      %p174 = scmp.eq.s32.totalorder %s22, 0
      %p175 = por %p173, %p174
      %s176 = ssub.s32 %s16, %s23
      %p177 = scmp.eq.s32.totalorder %s176, 0
      %s179 = sadd.s32 %s178, 1
      %s180 = scalar_select %p177, %s178, %s179
      %p183 = pneg %p177
      %p184 = scmp.eq.s32.totalorder %s16, 1
      %p185 = por %p183, %p184
      %p186 = scmp.ne.s32.totalorder %s178, %s181
      %p187 = scmp.eq.s32.totalorder %s16, 0
      %p188 = por %p186, %p187
      %p189 = scmp.ne.s32.totalorder %s178, %s181
      %p190 = scmp.eq.s32.totalorder %s21, 1
      %p191 = por %p189, %p190
      %p192 = scmp.ne.s32.totalorder %s181, %s182
      %p193 = scmp.eq.s32.totalorder %s21, 0
      %p194 = por %p192, %p193
      %p195 = scmp.ne.s32.totalorder %s181, %s182
      %p196 = scmp.eq.s32.totalorder %s22, 1
      %p197 = por %p195, %p196
      %p199 = scmp.ne.s32.totalorder %s182, %s198
      %p200 = scmp.eq.s32.totalorder %s22, 0
      %p201 = por %p199, %p200
      %p202 = scmp.le.s32.totalorder 1, %s16
      %p203 = scmp.lt.s32.totalorder %s16, 3
      %p204 = pnand %p202, %p203
      %p205 = pneg %p204
      // Predicated region
      $region9: #{mlp_forward.1} parent=5 // pred_check
        _
      $region10: #{mlp_forward.1} parent=5 // pred_check_branch
        %207 = sbr.rel (%p204) target = $region12
      $region11: #{mlp_forward.1} parent=5 // pred_region
        %s208 = ssub.s32 %s16, 1
        // Predicated region
        $region13: #{mlp_forward.1} parent=11 // pred_check
          %p209 = pneg %p63
        $region14: #{mlp_forward.1} parent=11 // pred_check_branch
          %211 = sbr.rel (%p209) target = $region16
        $region15: #{mlp_forward.1} parent=11 // pred_region
          _
        $region16: #{mlp_forward.1} parent=11 // pred_fallthru
          _
        // Predicated region
        $region17: #{mlp_forward.1} parent=11 // pred_check
          %p212 = pneg %p84
        $region18: #{mlp_forward.1} parent=11 // pred_check_branch
          %214 = sbr.rel (%p212) target = $region20
        $region19: #{mlp_forward.1} parent=11 // pred_region
          _
        $region20: #{mlp_forward.1} parent=11 // pred_fallthru
          _
        // Predicated region
        $region21: #{mlp_forward.1} parent=11 // pred_check
          %p215 = pneg %p105
        $region22: #{mlp_forward.1} parent=11 // pred_check_branch
          %217 = sbr.rel (%p215) target = $region24
        $region23: #{mlp_forward.1} parent=11 // pred_region
          _
        $region24: #{mlp_forward.1} parent=11 // pred_fallthru
          _
        // Predicated region
        $region25: #{mlp_forward.1} parent=11 // pred_check
          %p218 = pneg %p126
        $region26: #{mlp_forward.1} parent=11 // pred_check_branch
          %220 = sbr.rel (%p218) target = $region28
        $region27: #{mlp_forward.1} parent=11 // pred_region
          _
        $region28: #{mlp_forward.1} parent=11 // pred_fallthru
          _
        // Predicated region
        $region29: #{mlp_forward.1} parent=11 // pred_check
          %p221 = pneg %p147
        $region30: #{mlp_forward.1} parent=11 // pred_check_branch
          %223 = sbr.rel (%p221) target = $region32
        $region31: #{mlp_forward.1} parent=11 // pred_region
          _
        $region32: #{mlp_forward.1} parent=11 // pred_fallthru
          _
        // Predicated region
        $region33: #{mlp_forward.1} parent=11 // pred_check
          %p224 = pneg %p168
        $region34: #{mlp_forward.1} parent=11 // pred_check_branch
          %226 = sbr.rel (%p224) target = $region36
        $region35: #{mlp_forward.1} parent=11 // pred_region
          _
        $region36: #{mlp_forward.1} parent=11 // pred_fallthru
          _
      $region12: #{mlp_forward.1} parent=5 // pred_fallthru
        _
      %p227 = scmp.lt.s32.totalorder %s16, 2
      // Predicated region
      $region37: #{mlp_forward.1} parent=5 // pred_check
        %p228 = pneg %p227
      $region38: #{mlp_forward.1} parent=5 // pred_check_branch
        %230 = sbr.rel (%p228) target = $region40
      $region39: #{mlp_forward.1} parent=5 // pred_region
        // Predicated region
        $region41: #{mlp_forward.1} parent=39 // pred_check
          %p231 = pneg %p36
        $region42: #{mlp_forward.1} parent=39 // pred_check_branch
          %233 = sbr.rel (%p231) target = $region44
        $region43: #{mlp_forward.1} parent=39 // pred_region
          %p234 = scmp.lt.s32.totalorder %s16, 1
          %s235 = scalar_select %p234, %s16, 1
          %s236 = smul.addr %s235, 8
          %s237 = scalar_lea.vmem %s0, %s236
        $region44: #{mlp_forward.1} parent=39 // pred_fallthru
          _
      $region40: #{mlp_forward.1} parent=5 // pred_fallthru
        _
      %p238 = scmp.le.s32.totalorder 1, %s16
      %p239 = scmp.lt.s32.totalorder %s16, 3
      %p240 = pnand %p238, %p239
      %p241 = pneg %p240
      // Predicated region
      $region45: #{mlp_forward.1} parent=5 // pred_check
        _
      $region46: #{mlp_forward.1} parent=5 // pred_check_branch
        %243 = sbr.rel (%p240) target = $region48
      $region47: #{mlp_forward.1} parent=5 // pred_region
        %s244 = ssub.s32 %s16, 1
        %p245 = scmp.lt.s32.totalorder %s21, 1
        %s246 = scalar_select %p245, %s21, 1
        %s247 = smul.addr %s246, 8
        %s248 = scalar_lea.vmem %s0, %s247
        %p249 = pneg %p42
        %p250 = pneg %p39
        %p251 = pneg %p63
        %p252 = pneg %p60
        %p253 = pneg %p84
        %p254 = pneg %p81
        %p255 = pneg %p105
        %p256 = pneg %p102
        %p257 = pneg %p126
        %p258 = pneg %p123
        %p259 = pneg %p147
        %p260 = pneg %p144
        %p261 = pneg %p168
        %p262 = pneg %p165
        %p263 = pneg %p194
        %p264 = pneg %p191
        %s265 = sand.u32 %s181, 1
        %s266 = scalar_lea.sflag [#allocation3], %s265
        %s267 = sand.u32 %s181, 1
        %s268 = smul.addr %s267, 8
        %s269 = scalar_lea.vmem [#allocation2], %s268
        %p270 = scmp.lt.s32.totalorder %s21, 1
        %s271 = scalar_select %p270, %s21, 1
        %s272 = smul.addr %s271, 8
        %s273 = scalar_lea.vmem %s0, %s272
        %v274 = vld [vmem:[%s273] sm:$0xff]
        %v275 = vld [vmem:[%s1] sm:$0xff]
        %v276 = vld [vmem:[%s1 + $0x8] sm:$0xff]
        %v277 = vld [vmem:[%s1 + $0x10] sm:$0xff]
        %v278 = vld [vmem:[%s1 + $0x18] sm:$0xff]
        %v279 = vld [vmem:[%s1 + $0x20] sm:$0xff]
        %v280 = vld [vmem:[%s1 + $0x28] sm:$0xff]
        %v281 = vld [vmem:[%s1 + $0x30] sm:$0xff]
        %v282 = vld [vmem:[%s1 + $0x38] sm:$0xff]
        %v283 = vld [vmem:[%s1 + $0x40] sm:$0xff]
        %v284 = vld [vmem:[%s1 + $0x48] sm:$0xff]
        %v285 = vld [vmem:[%s1 + $0x50] sm:$0xff]
        %v286 = vld [vmem:[%s1 + $0x58] sm:$0xff]
        %v287 = vld [vmem:[%s1 + $0x60] sm:$0xff]
        %v288 = vld [vmem:[%s1 + $0x68] sm:$0xff]
        %v289 = vld [vmem:[%s1 + $0x70] sm:$0xff]
        %v290 = vld [vmem:[%s1 + $0x78] sm:$0xff]
        %v291 = vld [vmem:[%s2] sm:$0x1]
        %v293 = vperm.slane %v291, 0
        %295 = vmatpush.msra.mxu0 %v290
        %296 = vmatpush.msra.mxu0 %v289
        %297 = vmatpush.msra.mxu0 %v288
        %298 = vmatpush.msra.mxu0 %v287
        %299 = vmatpush.msra.mxu0 %v286
        %300 = vmatpush.msra.mxu0 %v285
        %301 = vmatpush.msra.mxu0 %v284
        %302 = vmatpush.msra.mxu0 %v283
        %303 = vmatpush.msra.mxu0 %v282
        %304 = vmatpush.msra.mxu0 %v281
        %305 = vmatpush.msra.mxu0 %v280
        %306 = vmatpush.msra.mxu0 %v279
        %307 = vmatpush.msra.mxu0 %v278
        %308 = vmatpush.msra.mxu0 %v277
        %309 = vmatpush.msra.mxu0 %v276
        %310 = vmatpush.msra.mxu0 %v275
        %311 = vmatmul.f32.gmra.mxu0 %v274
        %v312 = vpop.f32.mrf.mxu0
        %v313 = vadd.f32 %v293, %v312
        %314 = vdwg.mxu0
        %v315 = vmul.f32 %v313, 0.5
        %v316 = vmul.f32 %v313, 0.70710677
        %v317 = vmul.f32 %v316, %v316
        %v318 = vmin.f32 16.0, %v317
        %v319 = vmul.f32 %v318, 2.1237322e-06
        %v320 = vadd.f32 %v319, 0.00028619796
        %v321 = vmul.f32 %v318, %v320
        %v322 = vadd.f32 %v321, 0.0036580483
        %v323 = vmul.f32 %v318, %v322
        %v324 = vadd.f32 %v323, 0.05243302
        %v325 = vmul.f32 %v318, %v324
        %v326 = vadd.f32 %v325, 0.18741608
        %v327 = vmul.f32 %v318, %v326
        %v328 = vadd.f32 %v327, 1.1283791
        %v329 = vmul.f32 %v316, %v328
        %v330 = vmul.f32 %v318, 3.8918573e-05
        %v331 = vadd.f32 %v330, 0.001143296
        %v332 = vmul.f32 %v318, %v331
        %v333 = vadd.f32 %v332, 0.014752088
        %v334 = vmul.f32 %v318, %v333
        %v335 = vadd.f32 %v334, 0.112945676
        %v336 = vmul.f32 %v318, %v335
        %v337 = vadd.f32 %v336, 0.4994258
        %v338 = vmul.f32 %v318, %v337
        %v339 = vadd.f32 %v338, 1.0
        %v340 = vrcp.pop %v339
        %v341 = vmul.f32 %v339, %v340
        %v342 = vsub.f32 1.0, %v341
        %v343 = vmul.f32 %v340, %v342
        %v344 = vadd.f32 %v340, %v343
        %vm345 = vweird.f32 %v339
        %vm346 = vweird.f32 %v340
        %vm347 = vmor %vm345, %vm346
        %v348 = vsel %vm347, %v340, %v344
        %v349 = vand.u32 2147483647, %v339
        %vm350 = vcmp.eq.f32.partialorder %v349, 8.507059e+37
        %v351 = vand.u32 %v339, 2147483648
        %v352 = vor.u32 1.1754944e-38, %v351
        %v353 = vsel %vm350, %v352, %v348
        %v354 = vmul.f32 %v329, %v353
        %v355 = vmin.f32 %v354, 1.0
        %v356 = vmax.f32 %v355, -1.0
        %v357 = vadd.f32 %v356, 1.0
        %v358 = vmul.f32 %v315, %v357
        %v359 = vld [vmem:[%s3] sm:$0xff]
        %v360 = vld [vmem:[%s3 + $0x8] sm:$0xff]
        %v361 = vld [vmem:[%s3 + $0x10] sm:$0xff]
        %v362 = vld [vmem:[%s3 + $0x18] sm:$0xff]
        %v363 = vld [vmem:[%s3 + $0x20] sm:$0xff]
        %v364 = vld [vmem:[%s3 + $0x28] sm:$0xff]
        %v365 = vld [vmem:[%s3 + $0x30] sm:$0xff]
        %v366 = vld [vmem:[%s3 + $0x38] sm:$0xff]
        %v367 = vld [vmem:[%s3 + $0x40] sm:$0xff]
        %v368 = vld [vmem:[%s3 + $0x48] sm:$0xff]
        %v369 = vld [vmem:[%s3 + $0x50] sm:$0xff]
        %v370 = vld [vmem:[%s3 + $0x58] sm:$0xff]
        %v371 = vld [vmem:[%s3 + $0x60] sm:$0xff]
        %v372 = vld [vmem:[%s3 + $0x68] sm:$0xff]
        %v373 = vld [vmem:[%s3 + $0x70] sm:$0xff]
        %v374 = vld [vmem:[%s3 + $0x78] sm:$0xff]
        %v375 = vld [vmem:[%s4] sm:$0x1]
        %v377 = vperm.slane %v375, 0
        %379 = vmatpush.msra.mxu0 %v374
        %380 = vmatpush.msra.mxu0 %v373
        %381 = vmatpush.msra.mxu0 %v372
        %382 = vmatpush.msra.mxu0 %v371
        %383 = vmatpush.msra.mxu0 %v370
        %384 = vmatpush.msra.mxu0 %v369
        %385 = vmatpush.msra.mxu0 %v368
        %386 = vmatpush.msra.mxu0 %v367
        %387 = vmatpush.msra.mxu0 %v366
        %388 = vmatpush.msra.mxu0 %v365
        %389 = vmatpush.msra.mxu0 %v364
        %390 = vmatpush.msra.mxu0 %v363
        %391 = vmatpush.msra.mxu0 %v362
        %392 = vmatpush.msra.mxu0 %v361
        %393 = vmatpush.msra.mxu0 %v360
        %394 = vmatpush.msra.mxu0 %v359
        %395 = vmatmul.f32.gmra.mxu0 %v358
        %v396 = vpop.f32.mrf.mxu0
        %v397 = vadd.f32 %v377, %v396
        %398 = vdwg.mxu0
        %v399 = vmul.f32 %v397, 0.5
        %v400 = vmul.f32 %v397, 0.70710677
        %v401 = vmul.f32 %v400, %v400
        %v402 = vmin.f32 16.0, %v401
        %v403 = vmul.f32 %v402, 2.1237322e-06
        %v404 = vadd.f32 %v403, 0.00028619796
        %v405 = vmul.f32 %v402, %v404
        %v406 = vadd.f32 %v405, 0.0036580483
        %v407 = vmul.f32 %v402, %v406
        %v408 = vadd.f32 %v407, 0.05243302
        %v409 = vmul.f32 %v402, %v408
        %v410 = vadd.f32 %v409, 0.18741608
        %v411 = vmul.f32 %v402, %v410
        %v412 = vadd.f32 %v411, 1.1283791
        %v413 = vmul.f32 %v400, %v412
        %v414 = vmul.f32 %v402, 3.8918573e-05
        %v415 = vadd.f32 %v414, 0.001143296
        %v416 = vmul.f32 %v402, %v415
        %v417 = vadd.f32 %v416, 0.014752088
        %v418 = vmul.f32 %v402, %v417
        %v419 = vadd.f32 %v418, 0.112945676
        %v420 = vmul.f32 %v402, %v419
        %v421 = vadd.f32 %v420, 0.4994258
        %v422 = vmul.f32 %v402, %v421
        %v423 = vadd.f32 %v422, 1.0
        %v424 = vrcp.pop %v423
        %v425 = vmul.f32 %v423, %v424
        %v426 = vsub.f32 1.0, %v425
        %v427 = vmul.f32 %v424, %v426
        %v428 = vadd.f32 %v424, %v427
        %vm429 = vweird.f32 %v423
        %vm430 = vweird.f32 %v424
        %vm431 = vmor %vm429, %vm430
        %v432 = vsel %vm431, %v424, %v428
        %v433 = vand.u32 2147483647, %v423
        %vm434 = vcmp.eq.f32.partialorder %v433, 8.507059e+37
        %v435 = vand.u32 %v423, 2147483648
        %v436 = vor.u32 1.1754944e-38, %v435
        %v437 = vsel %vm434, %v436, %v432
        %v438 = vmul.f32 %v413, %v437
        %v439 = vmin.f32 %v438, 1.0
        %v440 = vmax.f32 %v439, -1.0
        %v441 = vadd.f32 %v440, 1.0
        %v442 = vmul.f32 %v399, %v441
        %v443 = vld [vmem:[%s5] sm:$0xff]
        %v444 = vld [vmem:[%s5 + $0x8] sm:$0xff]
        %v445 = vld [vmem:[%s5 + $0x10] sm:$0xff]
        %v446 = vld [vmem:[%s5 + $0x18] sm:$0xff]
        %v447 = vld [vmem:[%s5 + $0x20] sm:$0xff]
        %v448 = vld [vmem:[%s5 + $0x28] sm:$0xff]
        %v449 = vld [vmem:[%s5 + $0x30] sm:$0xff]
        %v450 = vld [vmem:[%s5 + $0x38] sm:$0xff]
        %v451 = vld [vmem:[%s5 + $0x40] sm:$0xff]
        %v452 = vld [vmem:[%s5 + $0x48] sm:$0xff]
        %v453 = vld [vmem:[%s5 + $0x50] sm:$0xff]
        %v454 = vld [vmem:[%s5 + $0x58] sm:$0xff]
        %v455 = vld [vmem:[%s5 + $0x60] sm:$0xff]
        %v456 = vld [vmem:[%s5 + $0x68] sm:$0xff]
        %v457 = vld [vmem:[%s5 + $0x70] sm:$0xff]
        %v458 = vld [vmem:[%s5 + $0x78] sm:$0xff]
        %v459 = vld [vmem:[%s6] sm:$0x1]
        %v461 = vperm.slane %v459, 0
        %463 = vmatpush.msra.mxu0 %v458
        %464 = vmatpush.msra.mxu0 %v457
        %465 = vmatpush.msra.mxu0 %v456
        %466 = vmatpush.msra.mxu0 %v455
        %467 = vmatpush.msra.mxu0 %v454
        %468 = vmatpush.msra.mxu0 %v453
        %469 = vmatpush.msra.mxu0 %v452
        %470 = vmatpush.msra.mxu0 %v451
        %471 = vmatpush.msra.mxu0 %v450
        %472 = vmatpush.msra.mxu0 %v449
        %473 = vmatpush.msra.mxu0 %v448
        %474 = vmatpush.msra.mxu0 %v447
        %475 = vmatpush.msra.mxu0 %v446
        %476 = vmatpush.msra.mxu0 %v445
        %477 = vmatpush.msra.mxu0 %v444
        %478 = vmatpush.msra.mxu0 %v443
        %479 = vmatmul.f32.gmra.mxu0 %v442
        %v480 = vpop.f32.mrf.mxu0
        %v481 = vadd.f32 %v461, %v480
        %482 = vdwg.mxu0
        %483 = vst [vmem:[%s269] sm:$0xff] %v481
        %s484 = sand.u32 %s181, 1
        %s485 = scalar_lea.sflag [#allocation3], %s484
        %s486 = sand.u32 %s181, 1
        %s487 = smul.addr %s486, 8
        %s488 = scalar_lea.vmem [#allocation2], %s487
        // Predicated region
        $region49: #{mlp_forward.1} parent=47 // pred_check
          %p489 = pneg %p191
        $region50: #{mlp_forward.1} parent=47 // pred_check_branch
          %491 = sbr.rel (%p489) target = $region52
        $region51: #{mlp_forward.1} parent=47 // pred_region
          %493 = vsyncadd %s485, 0
          %s494 = smul.addr %s21, 8
          %s495 = scalar_lea.hbm %s7, %s494
          %s497 = sshll.u32 %s488, 4
          %s498 = int_to_ptr.vmem [resolvable:$true] %s497
          %s499 = sshll.u32 %s495, 4
          %s500 = int_to_ptr.hbm [resolvable:$true] %s499
          %502 = dma.vmem_to_hbm [thread:$0]  %s498, 128, %s500, %s485
        $region52: #{mlp_forward.1} parent=47 // pred_fallthru
          _
      $region48: #{mlp_forward.1} parent=5 // pred_fallthru
        _
      %p503 = scmp.le.s32.totalorder 2, %s16
      // Predicated region
      $region53: #{mlp_forward.1} parent=5 // pred_check
        %p504 = pneg %p503
      $region54: #{mlp_forward.1} parent=5 // pred_check_branch
        %506 = sbr.rel (%p504) target = $region56
      $region55: #{mlp_forward.1} parent=5 // pred_region
        %s507 = ssub.s32 %s16, 2
        // Predicated region
        $region57: #{mlp_forward.1} parent=55 // pred_check
          %p508 = pneg %p197
        $region58: #{mlp_forward.1} parent=55 // pred_check_branch
          %510 = sbr.rel (%p508) target = $region60
        $region59: #{mlp_forward.1} parent=55 // pred_region
          %s511 = sand.u32 %s182, 1
          %s512 = scalar_lea.sflag [#allocation3], %s511
          %s513 = sand.u32 %s182, 1
          %s514 = smul.addr %s513, 8
          %s515 = scalar_lea.vmem [#allocation2], %s514
          %517 = dma.done %s512, 128
        $region60: #{mlp_forward.1} parent=55 // pred_fallthru
          _
      $region56: #{mlp_forward.1} parent=5 // pred_fallthru
        _
    $region6: #{mlp_forward.1} parent=1 // loop_footer
      %s20 = sadd.s32 1, %s16
    $region7: #{mlp_forward.1} parent=1 // loop_footer_branch
      %15 = sbr.rel target = $region3
    $region8: #{mlp_forward.1} parent=1 // loop_exit
      _
    %518 = vsyncpa [#allocation3], 1
    %s519 = scalar_lea.sflag [#allocation3], 1
    %520 = vsyncpa %s519, 1

</llo_original>
